<compile_context>
chip_gen: v6e
topology: v6e:2x2x1
jax: 0.10.0
libtpu: 0.0.40
codegen_flags: <defaults>
</compile_context>

<pallas_src>
import jax
import jax.numpy as jnp
from jax.experimental import pallas as pl
from jax.experimental.pallas import tpu as pltpu

_LANE = 128
_TARGET_TILE_BYTES = 4 * 1024 * 1024     # ~4 MiB per x tile
_VMEM_LIMIT_BYTES = 32 * 1024 * 1024     # safe on v5e/v6e (128 MiB) and v7x (64 MiB)
_TINY_BYTES = 64 * 1024                  # below this, plain XLA add is faster


def _add_pe_kernel(x_ref, pe_ref, o_ref):
    # x_ref/o_ref: (Bt, tile_r, 128); pe_ref: (tile_r, 128).
    # Pure element-wise add (PE precomputed); broadcast over the batch-tile dim.
    o_ref[...] = x_ref[...] + pe_ref[...][None, :, :]


def _make_pe_table(seq_len: int, channels: int, max_len: int, dtype) -> jax.Array:
    """Reproduces the PyTorch buffer construction for the first `seq_len` rows."""
    position = jnp.arange(seq_len, dtype=jnp.float32)[:, None]                 # (T, 1)
    div_term = jnp.exp(
        jnp.arange(0, channels, 2, dtype=jnp.float32)
        * -(jnp.log(jnp.float32(max_len)) / channels)
    )                                                                          # (C//2,)
    args = position * div_term                                                 # (T, C//2)
    # Interleave sin/cos exactly like pe[:, 0::2]=sin, pe[:, 1::2]=cos.
    pe = jnp.stack([jnp.sin(args), jnp.cos(args)], axis=-1).reshape(seq_len, channels)
    return pe.astype(dtype)


def positional_encoding_add(
    x: jax.Array,
    *,
    max_len: int = 10000,
    force_pallas: bool = False,
    donate: bool = False,
) -> jax.Array:
    """x: (B, T, C). Returns x + PE[:T]. PE table precomputed; add in Pallas."""
    B, T, C = x.shape
    assert C % 2 == 0, "channels must be even (matches PyTorch construction)"
    assert T <= max_len

    itemsize = jnp.dtype(x.dtype).itemsize
    pe = _make_pe_table(T, C, max_len, x.dtype)          # (T, C), same dtype as x

    # Tiny inputs: launch + per-step overhead dominates -> let XLA fuse the add.
    if (not force_pallas) and (B * T * C * itemsize < _TINY_BYTES):
        return x + pe[None, :, :]

    # ---- Lane-dense layout: flatten (T, C) and pad to a multiple of 128 -------
    flat = T * C
    flat_p = ((flat + _LANE - 1) // _LANE) * _LANE
    x2 = x.reshape(B, flat)
    pe2 = pe.reshape(flat)
    if flat_p != flat:
        x2 = jnp.pad(x2, ((0, 0), (0, flat_p - flat)))
        pe2 = jnp.pad(pe2, ((0, flat_p - flat),))
    R = flat_p // _LANE
    x_flat = x2.reshape(B, R, _LANE)
    pe_flat = pe2.reshape(R, _LANE)

    # dtype-aware sublane granularity: f32 -> 8, bf16 -> 16, int8/fp8 -> 32.
    sublane = max(8, 32 // itemsize)
    row_bytes = _LANE * itemsize
    target_rows = max(sublane, (_TARGET_TILE_BYTES // row_bytes) // sublane * sublane)

    if R > target_rows:
        # Regime A: large per-batch slab. Tile over R (~4 MiB tiles), batch
        # innermost so the PE block index is constant across inner steps.
        tile_r = target_rows
        n_r = pl.cdiv(R, tile_r)                          # >= 2 by construction
        grid = (n_r, B)
        in_specs = [
            pl.BlockSpec((1, tile_r, _LANE), lambda r, b: (b, r, 0)),
            pl.BlockSpec((tile_r, _LANE), lambda r, b: (r, 0)),
        ]
        out_spec = pl.BlockSpec((1, tile_r, _LANE), lambda r, b: (b, r, 0))
        semantics = ("parallel", "parallel")
    else:
        # Regime B: small per-batch slab. Block over batch to amortise the
        # ~0.35 us/step overhead and fill vregs; PE is one whole-R block with a
        # constant index_map (fetched once, broadcast-added in the kernel).
        tile_r = R                                        # full extent -> always legal
        bt = max(1, target_rows // max(R, 1))
        if B >= 2:
            bt = min(bt, pl.cdiv(B, 2))                   # >= 2 blocks for megacore
        bt = min(bt, B)
        grid = (pl.cdiv(B, bt),)
        in_specs = [
            pl.BlockSpec((bt, tile_r, _LANE), lambda b: (b, 0, 0)),
            pl.BlockSpec((tile_r, _LANE), lambda b: (0, 0)),
        ]
        out_spec = pl.BlockSpec((bt, tile_r, _LANE), lambda b: (b, 0, 0))
        semantics = ("parallel",)

    call_kwargs = {}
    if donate:
        # Output has identical shape/dtype to x_flat (input 0); alias to drop
        # the separate output allocation when the caller donates x.
        call_kwargs["input_output_aliases"] = {0: 0}

    out_flat = pl.pallas_call(
        _add_pe_kernel,
        out_shape=jax.ShapeDtypeStruct((B, R, _LANE), x.dtype),
        grid_spec=pltpu.PrefetchScalarGridSpec(
            num_scalar_prefetch=0,
            grid=grid,
            in_specs=in_specs,
            out_specs=out_spec,
        ),
        compiler_params=pltpu.CompilerParams(
            dimension_semantics=semantics,
            vmem_limit_bytes=_VMEM_LIMIT_BYTES,
        ),
        **call_kwargs,
    )(x_flat, pe_flat)

    out2 = out_flat.reshape(B, flat_p)
    if flat_p != flat:
        out2 = out2[:, :flat]
    return out2.reshape(B, T, C)


def _reference_pe_add(x: jax.Array, max_len: int = 10000) -> jax.Array:
    """Pure-JAX reproduction of the PyTorch buffer + forward, for verification."""
    B, T, C = x.shape
    position = jnp.arange(max_len, dtype=jnp.float32)[:, None]
    div_term = jnp.exp(
        jnp.arange(0, C, 2, dtype=jnp.float32)
        * -(jnp.log(jnp.float32(max_len)) / C)
    )
    pe = jnp.zeros((max_len, C), dtype=jnp.float32)
    pe = pe.at[:, 0::2].set(jnp.sin(position * div_term))
    pe = pe.at[:, 1::2].set(jnp.cos(position * div_term))
    return x + pe[None, :T, :].astype(x.dtype)


if __name__ == "__main__":
    key = jax.random.PRNGKey(0)
    max_len = 10000

    # 1) Demo shape implied by the module (B, T, C); force the Pallas path so
    #    the kernel itself is exercised even though the input is tiny.
    k1, k2, k3, k4 = jax.random.split(key, 4)
    x1 = jax.random.normal(k1, (2, 16, 32), dtype=jnp.float32)
    out1 = jax.block_until_ready(
        positional_encoding_add(x1, max_len=max_len, force_pallas=True))
    ref1 = _reference_pe_add(x1, max_len=max_len)
    assert out1.shape == ref1.shape and out1.dtype == ref1.dtype
    assert jnp.allclose(out1, ref1, atol=1e-5, rtol=1e-5), "mismatch (demo)"

    # 2) T*C not a multiple of 128 -> exercises the zero-pad lane-dense path.
    x2 = jax.random.normal(k2, (3, 9, 10), dtype=jnp.float32)
    out2 = jax.block_until_ready(
        positional_encoding_add(x2, max_len=max_len, force_pallas=True))
    ref2 = _reference_pe_add(x2, max_len=max_len)
    assert jnp.allclose(out2, ref2, atol=1e-5, rtol=1e-5), "mismatch (padded)"

    # 3) Small-R / larger-B case -> exercises batch blocking (Bt > 1).
    x3 = jax.random.normal(k3, (8, 64, 32), dtype=jnp.float32)
    out3 = jax.block_until_ready(positional_encoding_add(x3, max_len=max_len))
    ref3 = _reference_pe_add(x3, max_len=max_len)
    assert jnp.allclose(out3, ref3, atol=1e-5, rtol=1e-5), "mismatch (batched)"

    # 4) Tiny input -> auto XLA bypass path.
    x4 = jax.random.normal(k4, (1, 4, 8), dtype=jnp.float32)
    out4 = jax.block_until_ready(positional_encoding_add(x4, max_len=max_len))
    ref4 = _reference_pe_add(x4, max_len=max_len)
    assert jnp.allclose(out4, ref4, atol=1e-5, rtol=1e-5), "mismatch (tiny)"

    print("KERNEL_OK")
</pallas_src>

<mosaic_0001>
module attributes {stable_mosaic.version = 11 : i64} {
  func.func @_add_pe_kernel(%arg0: i32, %arg1: memref<1x4x128xf32, #tpu.memory_space<vmem>>, %arg2: memref<4x128xf32, #tpu.memory_space<vmem>>, %arg3: memref<1x4x128xf32, #tpu.memory_space<vmem>>) attributes {dimension_semantics = [#tpu.dimension_semantics<parallel>], iteration_bounds = array<i64: 2>, scalar_prefetch = 0 : i64, scratch_operands = 0 : i64, tpu.core_type = #tpu.core_type<tc>, window_params = [{transform_indices = @transform_0, window_bounds = array<i64: 1, 4, 128>}, {pipeline_mode = #tpu.pipeline_mode<synchronous>, transform_indices = @transform_1, window_bounds = array<i64: 4, 128>}, {transform_indices = @transform_2, window_bounds = array<i64: 1, 4, 128>}]} {
    %c0 = arith.constant 0 : index
    %c0_0 = arith.constant 0 : index
    %c0_1 = arith.constant 0 : index
    %0 = vector.load %arg1[%c0, %c0_0, %c0_1] : memref<1x4x128xf32, #tpu.memory_space<vmem>>, vector<1x4x128xf32>
    %c0_2 = arith.constant 0 : index
    %c0_3 = arith.constant 0 : index
    %1 = vector.load %arg2[%c0_2, %c0_3] : memref<4x128xf32, #tpu.memory_space<vmem>>, vector<4x128xf32>
    %2 = vector.shape_cast %1 : vector<4x128xf32> to vector<1x4x128xf32>
    %3 = arith.addf %0, %2 : vector<1x4x128xf32>
    %c0_4 = arith.constant 0 : index
    %c0_5 = arith.constant 0 : index
    %c0_6 = arith.constant 0 : index
    %4 = vector.load %arg3[%c0_4, %c0_5, %c0_6] : memref<1x4x128xf32, #tpu.memory_space<vmem>>, vector<1x4x128xf32>
    tpu.vector_store %arg3[%c0_4, %c0_5, %c0_6], %3 {strides = array<i32>} : memref<1x4x128xf32, #tpu.memory_space<vmem>>, vector<1x4x128xf32>,
    return
  }
  func.func @transform_0(%arg0: i32) -> (i32, i32, i32) {
    %c0_i32 = arith.constant 0 : i32
    %c0_i32_0 = arith.constant 0 : i32
    %c0_i32_1 = arith.constant 0 : i32
    return %arg0, %c0_i32, %c0_i32_0 : i32, i32, i32
  }
  func.func @transform_1(%arg0: i32) -> (i32, i32) {
    %c0_i32 = arith.constant 0 : i32
    %c0_i32_0 = arith.constant 0 : i32
    %c0_i32_1 = arith.constant 0 : i32
    return %c0_i32, %c0_i32_0 : i32, i32
  }
  func.func @transform_2(%arg0: i32) -> (i32, i32, i32) {
    %c0_i32 = arith.constant 0 : i32
    %c0_i32_0 = arith.constant 0 : i32
    %c0_i32_1 = arith.constant 0 : i32
    return %arg0, %c0_i32, %c0_i32_0 : i32, i32, i32
  }
}

</mosaic_0001>

<llo_original>
// kernel: tpu_custom_call.1
$region0: #{tpu_custom_call.1}
  #allocation0 [shape = 'u32[]', space=smem, size = 0x4, offset = 0x4, fixed_abs, tag = 'smem constant byte address 0x4 - core index']
  #allocation1 [shape = 'u32[144,128]{1,0:T(1,128)}', space=vmem, size = 0x12000, scoped, tag = 'internal scratch']
  %s0 = inlined_call_operand.hbm [shape: f32[2,4,128], index: 0, kind: input, shape index: {}]
  %s1 = inlined_call_operand.hbm [shape: f32[4,128], index: 1, kind: input, shape index: {}]
  %s2 = inlined_call_operand.hbm [shape: f32[2,4,128], index: 2, kind: output, shape index: {}]
  %s3 = sld [smem:[#allocation0]]
  $region49: #{tpu_custom_call.1} parent=0
    _
  %s5 = ssub.s32 1, %s3
  %s6 = scalar_select 0, %s5, %s3
  $region1: #{tpu_custom_call.1} parent=0
    #allocation2 [shape = 'u8[4096]{0}', space=vmem, size = 0x1000, scoped, tag = 'input window, operand 0']
    #allocation3 [shape = 's32[2]{0}', space=sflag, size = 0x8, scoped, tag = 'scoped memory for tpu_custom_call.1']
    #allocation4 [shape = 's32[2]{0}', space=sflag, size = 0x8, scoped, tag = 'scoped memory for tpu_custom_call.1']
    #allocation5 [shape = 'u8[2048]{0}', space=vmem, size = 0x800, scoped, tag = 'input window, operand 1, single buffered']
    #allocation6 [shape = 's32[1]{0}', space=sflag, size = 0x4, scoped, tag = 'scoped memory for tpu_custom_call.1']
    #allocation7 [shape = 'u8[4096]{0}', space=vmem, size = 0x1000, scoped, tag = 'output window, operand 0']
    %7 = vsyncpa [#allocation3], 0
    %s8 = scalar_lea.sflag [#allocation3], 1
    %9 = vsyncpa %s8, 0
    %10 = vsyncpa [#allocation6], 0
    %11 = vsyncpa [#allocation4], 0
    %s12 = scalar_lea.sflag [#allocation4], 1
    %13 = vsyncpa %s12, 0
    loop: start=0, step=1, limit=4
    $region2: #{tpu_custom_call.1} parent=1 // loop_pre_header
      _
    $region3: #{tpu_custom_call.1} parent=1 // loop_header
      %s15 = sphi 0, %s19
      %p16 = scmp.ge.s32.totalorder %s15, 4
      %s25 = sphi 0, %s27
      %s28 = sphi 0, %s25
      %s29 = sphi 0, %s28
      %s45 = sphi 0, %s29
      %s49 = sphi 0, %s49
      %s51 = sphi 0, %s49
      %s52 = sphi 0, %s51
      %s66 = sphi 0, %s52
      %s72 = sphi 0, %s74
      %s75 = sphi 0, %s72
      %s76 = sphi 0, %s75
      %s92 = sphi 0, %s76
    $region4: #{tpu_custom_call.1} parent=1 // loop_header_branch
      %18 = sbr.rel (%p16) target = $region8
    $region5: #{tpu_custom_call.1} parent=1 // loop_body
      %s20 = ssub.s32 %s15, 1
      %s21 = ssub.s32 %s15, 2
      %s22 = sadd.s32 %s15, 1
      %s23 = ssub.s32 %s15, %s22
      %p24 = scmp.eq.s32.totalorder %s23, 0
      %s26 = sadd.s32 %s25, 1
      %s27 = scalar_select %p24, %s25, %s26
      %p30 = pneg %p24
      %p31 = scmp.eq.s32.totalorder %s15, 1
      %p32 = por %p30, %p31
      %p33 = scmp.ne.s32.totalorder %s25, %s28
      %p34 = scmp.eq.s32.totalorder %s15, 0
      %p35 = por %p33, %p34
      %p36 = scmp.ne.s32.totalorder %s25, %s28
      %p37 = scmp.eq.s32.totalorder %s20, 1
      %p38 = por %p36, %p37
      %p39 = scmp.ne.s32.totalorder %s28, %s29
      %p40 = scmp.eq.s32.totalorder %s20, 0
      %p41 = por %p39, %p40
      %p42 = scmp.ne.s32.totalorder %s28, %s29
      %p43 = scmp.eq.s32.totalorder %s21, 1
      %p44 = por %p42, %p43
      %p46 = scmp.ne.s32.totalorder %s29, %s45
      %p47 = scmp.eq.s32.totalorder %s21, 0
      %p48 = por %p46, %p47
      %s50 = sadd.s32 %s49, 1
      %p53 = scmp.eq.s32.totalorder %s15, 1
      %p54 = scmp.ne.s32.totalorder %s49, %s51
      %p55 = scmp.eq.s32.totalorder %s15, 0
      %p56 = por %p54, %p55
      %p57 = scmp.ne.s32.totalorder %s49, %s51
      %p58 = scmp.eq.s32.totalorder %s20, 1
      %p59 = por %p57, %p58
      %p60 = scmp.ne.s32.totalorder %s51, %s52
      %p61 = scmp.eq.s32.totalorder %s20, 0
      %p62 = por %p60, %p61
      %p63 = scmp.ne.s32.totalorder %s51, %s52
      %p64 = scmp.eq.s32.totalorder %s21, 1
      %p65 = por %p63, %p64
      %p67 = scmp.ne.s32.totalorder %s52, %s66
      %p68 = scmp.eq.s32.totalorder %s21, 0
      %p69 = por %p67, %p68
      %s70 = ssub.s32 %s15, %s22
      %p71 = scmp.eq.s32.totalorder %s70, 0
      %s73 = sadd.s32 %s72, 1
      %s74 = scalar_select %p71, %s72, %s73
      %p77 = pneg %p71
      %p78 = scmp.eq.s32.totalorder %s15, 1
      %p79 = por %p77, %p78
      %p80 = scmp.ne.s32.totalorder %s72, %s75
      %p81 = scmp.eq.s32.totalorder %s15, 0
      %p82 = por %p80, %p81
      %p83 = scmp.ne.s32.totalorder %s72, %s75
      %p84 = scmp.eq.s32.totalorder %s20, 1
      %p85 = por %p83, %p84
      %p86 = scmp.ne.s32.totalorder %s75, %s76
      %p87 = scmp.eq.s32.totalorder %s20, 0
      %p88 = por %p86, %p87
      %p89 = scmp.ne.s32.totalorder %s75, %s76
      %p90 = scmp.eq.s32.totalorder %s21, 1
      %p91 = por %p89, %p90
      %p93 = scmp.ne.s32.totalorder %s76, %s92
      %p94 = scmp.eq.s32.totalorder %s21, 0
      %p95 = por %p93, %p94
      %p96 = scmp.le.s32.totalorder 1, %s15
      %p97 = scmp.lt.s32.totalorder %s15, 3
      %p98 = pnand %p96, %p97
      %p99 = pneg %p98
      // Predicated region
      $region9: #{tpu_custom_call.1} parent=5 // pred_check
        _
      $region10: #{tpu_custom_call.1} parent=5 // pred_check_branch
        %101 = sbr.rel (%p98) target = $region12
      $region11: #{tpu_custom_call.1} parent=5 // pred_region
        %s102 = ssub.s32 %s15, 1
        // Predicated region
        $region13: #{tpu_custom_call.1} parent=11 // pred_check
          %p103 = pneg %p62
        $region14: #{tpu_custom_call.1} parent=11 // pred_check_branch
          %105 = sbr.rel (%p103) target = $region16
        $region15: #{tpu_custom_call.1} parent=11 // pred_region
          %s107 = ssub.s32 64, 64
          %108 = vsyncadd [#allocation6], %s107
          %s110 = sshll.u32 [#allocation5], 4
          %s111 = int_to_ptr.vmem [resolvable:$true] %s110
          %113 = dma.hbm_to_vmem [thread:$0]  %s1, 64, %s111, [#allocation6]
        $region16: #{tpu_custom_call.1} parent=11 // pred_fallthru
          _
      $region12: #{tpu_custom_call.1} parent=5 // pred_fallthru
        _
      %p114 = scmp.lt.s32.totalorder %s15, 2
      // Predicated region
      $region17: #{tpu_custom_call.1} parent=5 // pred_check
        %p115 = pneg %p114
      $region18: #{tpu_custom_call.1} parent=5 // pred_check_branch
        %117 = sbr.rel (%p115) target = $region20
      $region19: #{tpu_custom_call.1} parent=5 // pred_region
        // Predicated region
        $region21: #{tpu_custom_call.1} parent=19 // pred_check
          %p118 = pneg %p35
        $region22: #{tpu_custom_call.1} parent=19 // pred_check_branch
          %120 = sbr.rel (%p118) target = $region24
        $region23: #{tpu_custom_call.1} parent=19 // pred_region
          %s121 = sand.u32 %s25, 1
          %s122 = scalar_lea.sflag [#allocation3], %s121
          %s123 = sand.u32 %s25, 1
          %s124 = smul.addr %s123, 4
          %s125 = scalar_lea.vmem [#allocation2], %s124
          %s127 = ssub.s32 64, 64
          %128 = vsyncadd %s122, %s127
          %s129 = smul.addr %s15, 64
          %s130 = scalar_lea.hbm %s0, %s129
          %s132 = sshll.u32 %s125, 4
          %s133 = int_to_ptr.vmem [resolvable:$true] %s132
          %135 = dma.hbm_to_vmem [thread:$0]  %s130, 64, %s133, %s122
        $region24: #{tpu_custom_call.1} parent=19 // pred_fallthru
          _
      $region20: #{tpu_custom_call.1} parent=5 // pred_fallthru
        _
      %p136 = scmp.le.s32.totalorder 1, %s15
      %p137 = scmp.lt.s32.totalorder %s15, 3
      %p138 = pnand %p136, %p137
      %p139 = pneg %p138
      // Predicated region
      $region25: #{tpu_custom_call.1} parent=5 // pred_check
        _
      $region26: #{tpu_custom_call.1} parent=5 // pred_check_branch
        %141 = sbr.rel (%p138) target = $region28
      $region27: #{tpu_custom_call.1} parent=5 // pred_region
        %s142 = ssub.s32 %s15, 1
        %s143 = sand.u32 %s28, 1
        %s144 = scalar_lea.sflag [#allocation3], %s143
        %s145 = sand.u32 %s28, 1
        %s146 = smul.addr %s145, 4
        %s147 = scalar_lea.vmem [#allocation2], %s146
        // Predicated region
        $region29: #{tpu_custom_call.1} parent=27 // pred_check
          %p148 = pneg %p41
        $region30: #{tpu_custom_call.1} parent=27 // pred_check_branch
          %150 = sbr.rel (%p148) target = $region32
        $region31: #{tpu_custom_call.1} parent=27 // pred_region
          %151 = dma.done %s144, 64
        $region32: #{tpu_custom_call.1} parent=27 // pred_fallthru
          _
        // Predicated region
        $region33: #{tpu_custom_call.1} parent=27 // pred_check
          %p152 = pneg %p62
        $region34: #{tpu_custom_call.1} parent=27 // pred_check_branch
          %154 = sbr.rel (%p152) target = $region36
        $region35: #{tpu_custom_call.1} parent=27 // pred_region
          %155 = dma.done [#allocation6], 64
        $region36: #{tpu_custom_call.1} parent=27 // pred_fallthru
          _
        %s156 = sand.u32 %s28, 1
        %s157 = scalar_lea.sflag [#allocation3], %s156
        %s158 = sand.u32 %s28, 1
        %s159 = smul.addr %s158, 4
        %s160 = scalar_lea.vmem [#allocation2], %s159
        %p161 = pneg %p41
        %p162 = pneg %p38
        %p163 = pneg %p62
        %p164 = pneg %p59
        %p165 = pneg %p88
        %p166 = pneg %p85
        %s167 = sand.u32 %s75, 1
        %s168 = scalar_lea.sflag [#allocation4], %s167
        %s169 = sand.u32 %s75, 1
        %s170 = smul.addr %s169, 4
        %s171 = scalar_lea.vmem [#allocation7], %s170
        %v172 = vld [vmem:[%s147] sm:$0xf]
        %v173 = vld [vmem:[#allocation5] sm:$0xf]
        %v174 = vadd.f32 %v172, %v173
        %175 = vst [vmem:[%s171] sm:$0xf] %v174
        %s176 = sand.u32 %s75, 1
        %s177 = scalar_lea.sflag [#allocation4], %s176
        %s178 = sand.u32 %s75, 1
        %s179 = smul.addr %s178, 4
        %s180 = scalar_lea.vmem [#allocation7], %s179
        // Predicated region
        $region37: #{tpu_custom_call.1} parent=27 // pred_check
          %p181 = pneg %p85
        $region38: #{tpu_custom_call.1} parent=27 // pred_check_branch
          %183 = sbr.rel (%p181) target = $region40
        $region39: #{tpu_custom_call.1} parent=27 // pred_region
          %s185 = ssub.s32 64, 64
          %186 = vsyncadd %s177, %s185
          %s187 = smul.addr %s20, 64
          %s188 = scalar_lea.hbm %s2, %s187
          %s190 = sshll.u32 %s180, 4
          %s191 = int_to_ptr.vmem [resolvable:$true] %s190
          %193 = dma.vmem_to_hbm [thread:$0]  %s191, 64, %s188, %s177
        $region40: #{tpu_custom_call.1} parent=27 // pred_fallthru
          _
      $region28: #{tpu_custom_call.1} parent=5 // pred_fallthru
        _
      %p194 = scmp.le.s32.totalorder 2, %s15
      // Predicated region
      $region41: #{tpu_custom_call.1} parent=5 // pred_check
        %p195 = pneg %p194
      $region42: #{tpu_custom_call.1} parent=5 // pred_check_branch
        %197 = sbr.rel (%p195) target = $region44
      $region43: #{tpu_custom_call.1} parent=5 // pred_region
        %s198 = ssub.s32 %s15, 2
        // Predicated region
        $region45: #{tpu_custom_call.1} parent=43 // pred_check
          %p199 = pneg %p91
        $region46: #{tpu_custom_call.1} parent=43 // pred_check_branch
          %201 = sbr.rel (%p199) target = $region48
        $region47: #{tpu_custom_call.1} parent=43 // pred_region
          %s202 = sand.u32 %s76, 1
          %s203 = scalar_lea.sflag [#allocation4], %s202
          %s204 = sand.u32 %s76, 1
          %s205 = smul.addr %s204, 4
          %s206 = scalar_lea.vmem [#allocation7], %s205
          %207 = dma.done %s203, 64
        $region48: #{tpu_custom_call.1} parent=43 // pred_fallthru
          _
      $region44: #{tpu_custom_call.1} parent=5 // pred_fallthru
        _
    $region6: #{tpu_custom_call.1} parent=1 // loop_footer
      %s19 = sadd.s32 1, %s15
    $region7: #{tpu_custom_call.1} parent=1 // loop_footer_branch
      %14 = sbr.rel target = $region3
    $region8: #{tpu_custom_call.1} parent=1 // loop_exit
      _
    %208 = vsyncpa [#allocation3], 1
    %s209 = scalar_lea.sflag [#allocation3], 1
    %210 = vsyncpa %s209, 1
    %211 = vsyncpa [#allocation6], 1
    %212 = vsyncpa [#allocation4], 1
    %s213 = scalar_lea.sflag [#allocation4], 1
    %214 = vsyncpa %s213, 1

</llo_original>
